<compile_context>
chip_gen: v5e
topology: v5e:2x2
jax: 0.10.0
libtpu: 0.0.40
codegen_flags: <defaults>
</compile_context>

<pallas_src>
import jax
import jax.numpy as jnp
import numpy as np
from jax import lax
from jax.experimental import pallas as pl
from jax.experimental.pallas import tpu as pltpu

_CHUNK = 128  # rows of the pairwise tile processed per inner-loop step


def _make_auc_numerator_kernel(n_chunks: int, chunk: int):
    """Builds the kernel computing per-row-block partial Mann-Whitney numerators."""

    def kernel(pos_ref, neg_ref, out_ref):
        # pos_ref: (TM, 1)    positive-masked scores for row block i (NaN elsewhere)
        # neg_ref: (1, TN)    negative-masked scores for col block j (NaN elsewhere)
        # out_ref: (1, 1, TN) lane-dense partial sums for row block i (revisited over j)
        j = pl.program_id(1)

        @pl.when(j == 0)
        def _init():
            out_ref[...] = jnp.zeros_like(out_ref)

        nr = neg_ref[...]                                   # (1, TN)
        one = jnp.float32(1.0)
        half = jnp.float32(0.5)
        zero = jnp.float32(0.0)

        def body(c, carry):
            r0 = pl.multiple_of(c * chunk, chunk)
            pc = pos_ref[pl.ds(r0, chunk), :]               # (chunk, 1)
            # 1.0 if p_pos > p_neg, 0.5 on ties, 0.0 otherwise.  NaN-masked
            # operands (wrong label / padding) compare false -> contribute 0.
            cmp = jnp.where(pc > nr, one, jnp.where(pc == nr, half, zero))
            # Mostly elementwise vreg adds (sublane-direction reduce); only a
            # tiny intra-vreg XLU reduce per lane group.  Accumulator is the
            # wide (1, TN) output block, so no loop-carried scalar dependency.
            out_ref[...] += jnp.sum(cmp, axis=0, keepdims=True)
            return carry

        lax.fori_loop(0, n_chunks, body, 0)

    return kernel


def roc_auc_pallas(y_pred: jax.Array, y_true: jax.Array,
                   *, tm: int = 1024, tn: int = 2048) -> jax.Array:
    """Pallas TPU implementation of the binary ROC AUC forward pass."""
    yp = jnp.ravel(y_pred).astype(jnp.float32)
    yt = jnp.ravel(y_true).astype(jnp.float32)
    n = yp.shape[0]

    # Clamp / align tile sizes: TM a multiple of the chunk size, TN of the lane width.
    tm_eff = max(_CHUNK, (min(tm, pl.cdiv(n, _CHUNK) * _CHUNK) // _CHUNK) * _CHUNK)
    tn_eff = max(128, (min(tn, pl.cdiv(n, 128) * 128) // 128) * 128)

    npr = pl.cdiv(n, tm_eff) * tm_eff
    npc = pl.cdiv(n, tn_eff) * tn_eff

    # Fold labels and padding into the operands: NaN never wins a comparison, so
    # masked rows/cols carry zero pair weight inside the kernel.
    is_pos = yt > 0.5
    nanv = jnp.float32(jnp.nan)
    pos_scores = jnp.where(is_pos, yp, nanv)
    neg_scores = jnp.where(is_pos, nanv, yp)
    pos_col = jnp.full((npr, 1), nanv, jnp.float32).at[:n, 0].set(pos_scores)
    neg_row = jnp.full((1, npc), nanv, jnp.float32).at[0, :n].set(neg_scores)

    grid = (npr // tm_eff, npc // tn_eff)
    kernel = _make_auc_numerator_kernel(tm_eff // _CHUNK, _CHUNK)

    partials = pl.pallas_call(
        kernel,
        # 3-D output so the last two dims of each block span the full array dims.
        out_shape=jax.ShapeDtypeStruct((grid[0], 1, tn_eff), jnp.float32),
        grid_spec=pltpu.PrefetchScalarGridSpec(
            num_scalar_prefetch=0,
            grid=grid,
            in_specs=[
                pl.BlockSpec((tm_eff, 1), lambda i, j: (i, 0)),   # pos scores, row block i
                pl.BlockSpec((1, tn_eff), lambda i, j: (0, j)),   # neg scores, col block j
            ],
            out_specs=pl.BlockSpec((1, 1, tn_eff), lambda i, j: (i, 0, 0)),
        ),
        compiler_params=pltpu.CompilerParams(
            # Row axis has independent per-block outputs -> shardable across
            # TensorCores (v7x megacore); column axis carries the accumulation.
            dimension_semantics=("parallel", "arbitrary"),
            vmem_limit_bytes=32 * 1024 * 1024,
        ),
    )(pos_col, neg_row)

    # Partial sums are bounded pair counts (exact in f32); combine + normalize in XLA.
    num = jnp.sum(partials)
    n_pos = jnp.sum(is_pos.astype(jnp.float32))
    n_neg = jnp.float32(n) - n_pos
    denom = n_pos * n_neg
    safe = jnp.where(denom > 0.0, denom, 1.0)
    # Single-class input (n_pos==0 or n_neg==0) -> 0.0 (sklearn raises; raising
    # is host-side behaviour, not expressible in the kernel/XLA graph).
    return jnp.where(denom > 0.0, num / safe, 0.0)


class MeanLoss:
    """Host-side running-mean bookkeeping matching the PyTorch MeanLoss API.

    forward() dispatches to loss_func, here the Pallas binary ROC AUC.
    update()/compute()/reset() are plain-Python running-mean state, not kernel work.
    """

    loss_func = staticmethod(roc_auc_pallas)

    def __init__(self):
        self.reset()

    def forward(self, y, t):
        return self.loss_func(y, t)

    __call__ = forward

    def reset(self):
        self.loss_sum = 0.0
        self.n_examples = 0

    def update(self, y, t):
        self.loss_sum += float(self(y, t)) * y.shape[0]
        self.n_examples += y.shape[0]

    def compute(self):
        return self.loss_sum / self.n_examples


def _roc_auc_ref(y_pred: np.ndarray, y_true: np.ndarray) -> float:
    """NumPy reference (Mann-Whitney), equivalent to sklearn binary roc_auc_score."""
    pos = y_pred[y_true > 0.5]
    neg = y_pred[y_true <= 0.5]
    gt = (pos[:, None] > neg[None, :]).astype(np.float64)
    eq = (pos[:, None] == neg[None, :]).astype(np.float64)
    return float((gt + 0.5 * eq).sum() / (len(pos) * len(neg)))


if __name__ == "__main__":
    N = 300  # deliberately not lane-aligned to exercise NaN padding + tiling

    key = jax.random.PRNGKey(0)
    kp, kt = jax.random.split(key)
    y_pred = jax.random.uniform(kp, (N,), dtype=jnp.float32)
    y_true = (jax.random.uniform(kt, (N,)) > 0.5).astype(jnp.float32)

    ref = _roc_auc_ref(np.asarray(y_pred), np.asarray(y_true))

    # Default (large) tiles -> single grid step with the in-kernel chunk loop;
    # small tiles -> 3x3 grid exercising cross-j accumulation and multiple
    # per-row-block output blocks.
    auc_big = jax.block_until_ready(roc_auc_pallas(y_pred, y_true))
    auc_small = jax.block_until_ready(
        roc_auc_pallas(y_pred, y_true, tm=128, tn=128))

    assert abs(float(auc_big) - ref) < 1e-5, (float(auc_big), ref)
    assert abs(float(auc_small) - ref) < 1e-5, (float(auc_small), ref)

    # Exercise the MeanLoss running-mean API once (host-side bookkeeping).
    metric = MeanLoss()
    metric.update(y_pred, y_true)
    assert abs(metric.compute() - ref) < 1e-5, (metric.compute(), ref)

    print("KERNEL_OK")
</pallas_src>

<mosaic_0001>
module attributes {stable_mosaic.version = 11 : i64} {
  func.func @kernel(%arg0: i32, %arg1: i32, %arg2: memref<384x1xf32, #tpu.memory_space<vmem>>, %arg3: memref<1x384xf32, #tpu.memory_space<vmem>>, %arg4: memref<1x1x384xf32, #tpu.memory_space<vmem>>) attributes {dimension_semantics = [#tpu.dimension_semantics<parallel>, #tpu.dimension_semantics<arbitrary>], iteration_bounds = array<i64: 1, 1>, scalar_prefetch = 0 : i64, scratch_operands = 0 : i64, tpu.core_type = #tpu.core_type<tc>, window_params = [{transform_indices = @transform_0, window_bounds = array<i64: 384, 1>}, {transform_indices = @transform_1, window_bounds = array<i64: 1, 384>}, {transform_indices = @transform_2, window_bounds = array<i64: 1, 1, 384>}]} {
    %c0_i32 = arith.constant 0 : i32
    %0 = arith.cmpi eq, %arg1, %c0_i32 : i32
    %1 = arith.extui %0 : i1 to i32
    %c0_i32_0 = arith.constant 0 : i32
    %2 = arith.cmpi ne, %1, %c0_i32_0 : i32
    scf.if %2 {
      %cst_6 = arith.constant 0.000000e+00 : f32
      %5 = vector.broadcast %cst_6 : f32 to vector<1x1x384xf32>
      %c0_7 = arith.constant 0 : index
      %c0_8 = arith.constant 0 : index
      %c0_9 = arith.constant 0 : index
      %6 = vector.load %arg4[%c0_7, %c0_8, %c0_9] : memref<1x1x384xf32, #tpu.memory_space<vmem>>, vector<1x1x384xf32>
      tpu.vector_store %arg4[%c0_7, %c0_8, %c0_9], %5 {strides = array<i32>} : memref<1x1x384xf32, #tpu.memory_space<vmem>>, vector<1x1x384xf32>,
    } else {
    }
    %c0 = arith.constant 0 : index
    %c0_1 = arith.constant 0 : index
    %3 = vector.load %arg3[%c0, %c0_1] : memref<1x384xf32, #tpu.memory_space<vmem>>, vector<1x384xf32>
    %cst = arith.constant 5.000000e-01 : f32
    %cst_2 = arith.constant 0.000000e+00 : f32
    %cst_3 = arith.constant 1.000000e+00 : f32
    %c0_i32_4 = arith.constant 0 : i32
    %c3_i32 = arith.constant 3 : i32
    %4 = arith.addi %c0_i32_4, %c3_i32 : i32
    %c1_i32 = arith.constant 1 : i32
    scf.for %arg5 = %c0_i32_4 to %4 step %c1_i32  : i32 {
      %c128_i32 = arith.constant 128 : i32
      %5 = arith.muli %arg5, %c128_i32 : i32
      %6 = tpu.assume_multiple %5, 128 : i32
      %7 = arith.index_cast %6 : i32 to index
      %c0_6 = arith.constant 0 : index
      %8 = vector.load %arg2[%7, %c0_6] : memref<384x1xf32, #tpu.memory_space<vmem>>, vector<128x1xf32>
      %9 = vector.broadcast %8 : vector<128x1xf32> to vector<128x384xf32>
      %10 = vector.broadcast %3 : vector<1x384xf32> to vector<128x384xf32>
      %11 = arith.cmpf ogt, %9, %10 : vector<128x384xf32>
      %12 = vector.broadcast %8 : vector<128x1xf32> to vector<128x384xf32>
      %13 = vector.broadcast %3 : vector<1x384xf32> to vector<128x384xf32>
      %14 = arith.cmpf oeq, %12, %13 : vector<128x384xf32>
      %15 = vector.broadcast %cst : f32 to vector<128x384xf32>
      %16 = vector.broadcast %cst_2 : f32 to vector<128x384xf32>
      %17 = arith.select %14, %15, %16 : vector<128x384xi1>, vector<128x384xf32>
      %18 = vector.broadcast %cst_3 : f32 to vector<128x384xf32>
      %19 = arith.select %11, %18, %17 : vector<128x384xi1>, vector<128x384xf32>
      %c0_7 = arith.constant 0 : index
      %c0_8 = arith.constant 0 : index
      %c0_9 = arith.constant 0 : index
      %20 = vector.load %arg4[%c0_7, %c0_8, %c0_9] : memref<1x1x384xf32, #tpu.memory_space<vmem>>, vector<1x1x384xf32>
      %cst_10 = arith.constant dense<0.000000e+00> : vector<384xf32>
      %21 = vector.multi_reduction <add>, %19, %cst_10 [0] : vector<128x384xf32> to vector<384xf32>
      %22 = vector.shape_cast %21 : vector<384xf32> to vector<1x384xf32>
      %23 = vector.shape_cast %22 : vector<1x384xf32> to vector<1x1x384xf32>
      %24 = arith.addf %20, %23 : vector<1x1x384xf32>
      %c0_11 = arith.constant 0 : index
      %c0_12 = arith.constant 0 : index
      %c0_13 = arith.constant 0 : index
      %25 = vector.load %arg4[%c0_11, %c0_12, %c0_13] : memref<1x1x384xf32, #tpu.memory_space<vmem>>, vector<1x1x384xf32>
      tpu.vector_store %arg4[%c0_11, %c0_12, %c0_13], %24 {strides = array<i32>} : memref<1x1x384xf32, #tpu.memory_space<vmem>>, vector<1x1x384xf32>,
    }
    %c3_i32_5 = arith.constant 3 : i32
    return
  }
  func.func @transform_0(%arg0: i32, %arg1: i32) -> (i32, i32) {
    %c0_i32 = arith.constant 0 : i32
    %c0_i32_0 = arith.constant 0 : i32
    return %arg0, %c0_i32 : i32, i32
  }
  func.func @transform_1(%arg0: i32, %arg1: i32) -> (i32, i32) {
    %c0_i32 = arith.constant 0 : i32
    %c0_i32_0 = arith.constant 0 : i32
    return %c0_i32, %arg1 : i32, i32
  }
  func.func @transform_2(%arg0: i32, %arg1: i32) -> (i32, i32, i32) {
    %c0_i32 = arith.constant 0 : i32
    %c0_i32_0 = arith.constant 0 : i32
    %c0_i32_1 = arith.constant 0 : i32
    return %arg0, %c0_i32, %c0_i32_0 : i32, i32, i32
  }
}

</mosaic_0001>

<llo_original>
// kernel: tpu_custom_call.1
$region0: #{tpu_custom_call.1}
  #allocation0 [shape = 'u32[]', space=smem, size = 0x4, offset = 0x4, fixed_abs, tag = 'smem constant byte address 0x4 - core index']
  #allocation1 [shape = 'u32[72,128]{1,0:T(1,128)}', space=vmem, size = 0x9000, scoped, tag = 'internal scratch']
  %s0 = inlined_call_operand.vmem [shape: f32[384,1], index: 0, kind: input, shape index: {}]
  %s1 = inlined_call_operand.vmem [shape: f32[1,384], index: 1, kind: input, shape index: {}]
  %s2 = inlined_call_operand.hbm [shape: f32[1,1,384], index: 2, kind: output, shape index: {}]
  %s3 = sld [smem:[#allocation0]]
  $region29: #{tpu_custom_call.1} parent=0
    _
  %s5 = ssub.s32 1, %s3
  %s6 = scalar_select 0, %s5, %s3
  $region1: #{tpu_custom_call.1} parent=0
    #allocation2 [shape = 'u8[1536]{0}', space=vmem, size = 0x800, scoped, tag = 'output window, operand 0, single buffered']
    #allocation3 [shape = 's32[1]{0}', space=sflag, size = 0x4, scoped, tag = 'scoped memory for tpu_custom_call.1']
    %7 = vsyncpa [#allocation3], 0
    // Predicated region
    $region2: #{tpu_custom_call.1} parent=1 // pred_check
      _
    $region3: #{tpu_custom_call.1} parent=1 // pred_check_branch
      %9 = sbr.rel (0) target = $region5
    $region4: #{tpu_custom_call.1} parent=1 // pred_region
      _
    $region5: #{tpu_custom_call.1} parent=1 // pred_fallthru
      _
    // Predicated region
    $region6: #{tpu_custom_call.1} parent=1 // pred_check
      _
    $region7: #{tpu_custom_call.1} parent=1 // pred_check_branch
      %11 = sbr.rel (0) target = $region9
    $region8: #{tpu_custom_call.1} parent=1 // pred_region
      _
    $region9: #{tpu_custom_call.1} parent=1 // pred_fallthru
      _
    %p12 = scmp.eq.s32.totalorder 0, 0
    // Predicated region
    $region10: #{tpu_custom_call.1} parent=1 // pred_check
      %p13 = pneg %p12
    $region11: #{tpu_custom_call.1} parent=1 // pred_check_branch
      %15 = sbr.rel (%p13) target = $region13
    $region12: #{tpu_custom_call.1} parent=1 // pred_region
      %v16 = vlaneseq
      %vm17 = vcmp.ge.s32.totalorder %v16, 0
      %vm18 = vcmp.lt.s32.totalorder %v16, 384
      %vm19 = vmand %vm17, %vm18
      %20 = vst.msk [vmem:[#allocation2] sm:$0x7] %vm19, 0.0
    $region13: #{tpu_custom_call.1} parent=1 // pred_fallthru
      _
    %v21 = vld [vmem:[%s1] sm:$0x7]
    loop: start=0, step=1, limit=3
    $region14: #{tpu_custom_call.1} parent=1 // loop_pre_header
      _
    $region15: #{tpu_custom_call.1} parent=1 // loop_header
      %s23 = sphi 0, %s27
      %p24 = scmp.ge.s32.totalorder %s23, 3
    $region16: #{tpu_custom_call.1} parent=1 // loop_header_branch
      %26 = sbr.rel (%p24) target = $region20
    $region17: #{tpu_custom_call.1} parent=1 // loop_body
      %s28 = smul.u32 %s23, 128
      %s29 = scalar_lea.vmem %s0, %s28
      %v30 = vld [vmem:[%s29] sm:$0xff]
      %v31 = vld [vmem:[%s29 + $0x8] sm:$0xff]
      %v32 = vld [vmem:[%s29 + $0x10] sm:$0xff]
      %v33 = vld [vmem:[%s29 + $0x18] sm:$0xff]
      %v34 = vld [vmem:[%s29 + $0x20] sm:$0xff]
      %v35 = vld [vmem:[%s29 + $0x28] sm:$0xff]
      %v36 = vld [vmem:[%s29 + $0x30] sm:$0xff]
      %v37 = vld [vmem:[%s29 + $0x38] sm:$0xff]
      %v38 = vld [vmem:[%s29 + $0x40] sm:$0xff]
      %v39 = vld [vmem:[%s29 + $0x48] sm:$0xff]
      %v40 = vld [vmem:[%s29 + $0x50] sm:$0xff]
      %v41 = vld [vmem:[%s29 + $0x58] sm:$0xff]
      %v42 = vld [vmem:[%s29 + $0x60] sm:$0xff]
      %v43 = vld [vmem:[%s29 + $0x68] sm:$0xff]
      %v44 = vld [vmem:[%s29 + $0x70] sm:$0xff]
      %v45 = vld [vmem:[%s29 + $0x78] sm:$0xff]
      %47 = vset.pattern.permute.xlu0 0
      %48 = vperm.xlu0 %47, %v30
      %v49 = vpop.permute.xlu0 %48
      %52 = vset.pattern.permute.xlu0 0
      %53 = vperm.xlu0 %52, %v31
      %v54 = vpop.permute.xlu0 %53
      %57 = vset.pattern.permute.xlu0 0
      %58 = vperm.xlu0 %57, %v32
      %v59 = vpop.permute.xlu0 %58
      %62 = vset.pattern.permute.xlu0 0
      %63 = vperm.xlu0 %62, %v33
      %v64 = vpop.permute.xlu0 %63
      %67 = vset.pattern.permute.xlu0 0
      %68 = vperm.xlu0 %67, %v34
      %v69 = vpop.permute.xlu0 %68
      %72 = vset.pattern.permute.xlu0 0
      %73 = vperm.xlu0 %72, %v35
      %v74 = vpop.permute.xlu0 %73
      %77 = vset.pattern.permute.xlu0 0
      %78 = vperm.xlu0 %77, %v36
      %v79 = vpop.permute.xlu0 %78
      %82 = vset.pattern.permute.xlu0 0
      %83 = vperm.xlu0 %82, %v37
      %v84 = vpop.permute.xlu0 %83
      %87 = vset.pattern.permute.xlu0 0
      %88 = vperm.xlu0 %87, %v38
      %v89 = vpop.permute.xlu0 %88
      %92 = vset.pattern.permute.xlu0 0
      %93 = vperm.xlu0 %92, %v39
      %v94 = vpop.permute.xlu0 %93
      %97 = vset.pattern.permute.xlu0 0
      %98 = vperm.xlu0 %97, %v40
      %v99 = vpop.permute.xlu0 %98
      %102 = vset.pattern.permute.xlu0 0
      %103 = vperm.xlu0 %102, %v41
      %v104 = vpop.permute.xlu0 %103
      %107 = vset.pattern.permute.xlu0 0
      %108 = vperm.xlu0 %107, %v42
      %v109 = vpop.permute.xlu0 %108
      %112 = vset.pattern.permute.xlu0 0
      %113 = vperm.xlu0 %112, %v43
      %v114 = vpop.permute.xlu0 %113
      %117 = vset.pattern.permute.xlu0 0
      %118 = vperm.xlu0 %117, %v44
      %v119 = vpop.permute.xlu0 %118
      %122 = vset.pattern.permute.xlu0 0
      %123 = vperm.xlu0 %122, %v45
      %v124 = vpop.permute.xlu0 %123
      %v127 = vperm.slane %v21, 0
      %v128 = vperm.slane %v21, 1
      %v129 = vperm.slane %v21, 2
      %vm133 = vcmp.gt.f32.partialorder %v49, %v127
      %vm134 = vcmp.gt.f32.partialorder %v49, %v128
      %vm135 = vcmp.gt.f32.partialorder %v49, %v129
      %vm136 = vcmp.gt.f32.partialorder %v54, %v127
      %vm137 = vcmp.gt.f32.partialorder %v54, %v128
      %vm138 = vcmp.gt.f32.partialorder %v54, %v129
      %vm139 = vcmp.gt.f32.partialorder %v59, %v127
      %vm140 = vcmp.gt.f32.partialorder %v59, %v128
      %vm141 = vcmp.gt.f32.partialorder %v59, %v129
      %vm142 = vcmp.gt.f32.partialorder %v64, %v127
      %vm143 = vcmp.gt.f32.partialorder %v64, %v128
      %vm144 = vcmp.gt.f32.partialorder %v64, %v129
      %vm145 = vcmp.gt.f32.partialorder %v69, %v127
      %vm146 = vcmp.gt.f32.partialorder %v69, %v128
      %vm147 = vcmp.gt.f32.partialorder %v69, %v129
      %vm148 = vcmp.gt.f32.partialorder %v74, %v127
      %vm149 = vcmp.gt.f32.partialorder %v74, %v128
      %vm150 = vcmp.gt.f32.partialorder %v74, %v129
      %vm151 = vcmp.gt.f32.partialorder %v79, %v127
      %vm152 = vcmp.gt.f32.partialorder %v79, %v128
      %vm153 = vcmp.gt.f32.partialorder %v79, %v129
      %vm154 = vcmp.gt.f32.partialorder %v84, %v127
      %vm155 = vcmp.gt.f32.partialorder %v84, %v128
      %vm156 = vcmp.gt.f32.partialorder %v84, %v129
      %vm157 = vcmp.gt.f32.partialorder %v89, %v127
      %vm158 = vcmp.gt.f32.partialorder %v89, %v128
      %vm159 = vcmp.gt.f32.partialorder %v89, %v129
      %vm160 = vcmp.gt.f32.partialorder %v94, %v127
      %vm161 = vcmp.gt.f32.partialorder %v94, %v128
      %vm162 = vcmp.gt.f32.partialorder %v94, %v129
      %vm163 = vcmp.gt.f32.partialorder %v99, %v127
      %vm164 = vcmp.gt.f32.partialorder %v99, %v128
      %vm165 = vcmp.gt.f32.partialorder %v99, %v129
      %vm166 = vcmp.gt.f32.partialorder %v104, %v127
      %vm167 = vcmp.gt.f32.partialorder %v104, %v128
      %vm168 = vcmp.gt.f32.partialorder %v104, %v129
      %vm169 = vcmp.gt.f32.partialorder %v109, %v127
      %vm170 = vcmp.gt.f32.partialorder %v109, %v128
      %vm171 = vcmp.gt.f32.partialorder %v109, %v129
      %vm172 = vcmp.gt.f32.partialorder %v114, %v127
      %vm173 = vcmp.gt.f32.partialorder %v114, %v128
      %vm174 = vcmp.gt.f32.partialorder %v114, %v129
      %vm175 = vcmp.gt.f32.partialorder %v119, %v127
      %vm176 = vcmp.gt.f32.partialorder %v119, %v128
      %vm177 = vcmp.gt.f32.partialorder %v119, %v129
      %vm178 = vcmp.gt.f32.partialorder %v124, %v127
      %vm179 = vcmp.gt.f32.partialorder %v124, %v128
      %vm180 = vcmp.gt.f32.partialorder %v124, %v129
      %vm181 = vcmp.eq.f32.partialorder %v49, %v127
      %vm182 = vcmp.eq.f32.partialorder %v49, %v128
      %vm183 = vcmp.eq.f32.partialorder %v49, %v129
      %vm184 = vcmp.eq.f32.partialorder %v54, %v127
      %vm185 = vcmp.eq.f32.partialorder %v54, %v128
      %vm186 = vcmp.eq.f32.partialorder %v54, %v129
      %vm187 = vcmp.eq.f32.partialorder %v59, %v127
      %vm188 = vcmp.eq.f32.partialorder %v59, %v128
      %vm189 = vcmp.eq.f32.partialorder %v59, %v129
      %vm190 = vcmp.eq.f32.partialorder %v64, %v127
      %vm191 = vcmp.eq.f32.partialorder %v64, %v128
      %vm192 = vcmp.eq.f32.partialorder %v64, %v129
      %vm193 = vcmp.eq.f32.partialorder %v69, %v127
      %vm194 = vcmp.eq.f32.partialorder %v69, %v128
      %vm195 = vcmp.eq.f32.partialorder %v69, %v129
      %vm196 = vcmp.eq.f32.partialorder %v74, %v127
      %vm197 = vcmp.eq.f32.partialorder %v74, %v128
      %vm198 = vcmp.eq.f32.partialorder %v74, %v129
      %vm199 = vcmp.eq.f32.partialorder %v79, %v127
      %vm200 = vcmp.eq.f32.partialorder %v79, %v128
      %vm201 = vcmp.eq.f32.partialorder %v79, %v129
      %vm202 = vcmp.eq.f32.partialorder %v84, %v127
      %vm203 = vcmp.eq.f32.partialorder %v84, %v128
      %vm204 = vcmp.eq.f32.partialorder %v84, %v129
      %vm205 = vcmp.eq.f32.partialorder %v89, %v127
      %vm206 = vcmp.eq.f32.partialorder %v89, %v128
      %vm207 = vcmp.eq.f32.partialorder %v89, %v129
      %vm208 = vcmp.eq.f32.partialorder %v94, %v127
      %vm209 = vcmp.eq.f32.partialorder %v94, %v128
      %vm210 = vcmp.eq.f32.partialorder %v94, %v129
      %vm211 = vcmp.eq.f32.partialorder %v99, %v127
      %vm212 = vcmp.eq.f32.partialorder %v99, %v128
      %vm213 = vcmp.eq.f32.partialorder %v99, %v129
      %vm214 = vcmp.eq.f32.partialorder %v104, %v127
      %vm215 = vcmp.eq.f32.partialorder %v104, %v128
      %vm216 = vcmp.eq.f32.partialorder %v104, %v129
      %vm217 = vcmp.eq.f32.partialorder %v109, %v127
      %vm218 = vcmp.eq.f32.partialorder %v109, %v128
      %vm219 = vcmp.eq.f32.partialorder %v109, %v129
      %vm220 = vcmp.eq.f32.partialorder %v114, %v127
      %vm221 = vcmp.eq.f32.partialorder %v114, %v128
      %vm222 = vcmp.eq.f32.partialorder %v114, %v129
      %vm223 = vcmp.eq.f32.partialorder %v119, %v127
      %vm224 = vcmp.eq.f32.partialorder %v119, %v128
      %vm225 = vcmp.eq.f32.partialorder %v119, %v129
      %vm226 = vcmp.eq.f32.partialorder %v124, %v127
      %vm227 = vcmp.eq.f32.partialorder %v124, %v128
      %vm228 = vcmp.eq.f32.partialorder %v124, %v129
      %v229 = vsel %vm181, 0.5, 0.0
      %v230 = vsel %vm182, 0.5, 0.0
      %v231 = vsel %vm183, 0.5, 0.0
      %v232 = vsel %vm184, 0.5, 0.0
      %v233 = vsel %vm185, 0.5, 0.0
      %v234 = vsel %vm186, 0.5, 0.0
      %v235 = vsel %vm187, 0.5, 0.0
      %v236 = vsel %vm188, 0.5, 0.0
      %v237 = vsel %vm189, 0.5, 0.0
      %v238 = vsel %vm190, 0.5, 0.0
      %v239 = vsel %vm191, 0.5, 0.0
      %v240 = vsel %vm192, 0.5, 0.0
      %v241 = vsel %vm193, 0.5, 0.0
      %v242 = vsel %vm194, 0.5, 0.0
      %v243 = vsel %vm195, 0.5, 0.0
      %v244 = vsel %vm196, 0.5, 0.0
      %v245 = vsel %vm197, 0.5, 0.0
      %v246 = vsel %vm198, 0.5, 0.0
      %v247 = vsel %vm199, 0.5, 0.0
      %v248 = vsel %vm200, 0.5, 0.0
      %v249 = vsel %vm201, 0.5, 0.0
      %v250 = vsel %vm202, 0.5, 0.0
      %v251 = vsel %vm203, 0.5, 0.0
      %v252 = vsel %vm204, 0.5, 0.0
      %v253 = vsel %vm205, 0.5, 0.0
      %v254 = vsel %vm206, 0.5, 0.0
      %v255 = vsel %vm207, 0.5, 0.0
      %v256 = vsel %vm208, 0.5, 0.0
      %v257 = vsel %vm209, 0.5, 0.0
      %v258 = vsel %vm210, 0.5, 0.0
      %v259 = vsel %vm211, 0.5, 0.0
      %v260 = vsel %vm212, 0.5, 0.0
      %v261 = vsel %vm213, 0.5, 0.0
      %v262 = vsel %vm214, 0.5, 0.0
      %v263 = vsel %vm215, 0.5, 0.0
      %v264 = vsel %vm216, 0.5, 0.0
      %v265 = vsel %vm217, 0.5, 0.0
      %v266 = vsel %vm218, 0.5, 0.0
      %v267 = vsel %vm219, 0.5, 0.0
      %v268 = vsel %vm220, 0.5, 0.0
      %v269 = vsel %vm221, 0.5, 0.0
      %v270 = vsel %vm222, 0.5, 0.0
      %v271 = vsel %vm223, 0.5, 0.0
      %v272 = vsel %vm224, 0.5, 0.0
      %v273 = vsel %vm225, 0.5, 0.0
      %v274 = vsel %vm226, 0.5, 0.0
      %v275 = vsel %vm227, 0.5, 0.0
      %v276 = vsel %vm228, 0.5, 0.0
      %v277 = vsel %vm133, 1.0, %v229
      %v278 = vsel %vm134, 1.0, %v230
      %v279 = vsel %vm135, 1.0, %v231
      %v280 = vsel %vm136, 1.0, %v232
      %v281 = vsel %vm137, 1.0, %v233
      %v282 = vsel %vm138, 1.0, %v234
      %v283 = vsel %vm139, 1.0, %v235
      %v284 = vsel %vm140, 1.0, %v236
      %v285 = vsel %vm141, 1.0, %v237
      %v286 = vsel %vm142, 1.0, %v238
      %v287 = vsel %vm143, 1.0, %v239
      %v288 = vsel %vm144, 1.0, %v240
      %v289 = vsel %vm145, 1.0, %v241
      %v290 = vsel %vm146, 1.0, %v242
      %v291 = vsel %vm147, 1.0, %v243
      %v292 = vsel %vm148, 1.0, %v244
      %v293 = vsel %vm149, 1.0, %v245
      %v294 = vsel %vm150, 1.0, %v246
      %v295 = vsel %vm151, 1.0, %v247
      %v296 = vsel %vm152, 1.0, %v248
      %v297 = vsel %vm153, 1.0, %v249
      %v298 = vsel %vm154, 1.0, %v250
      %v299 = vsel %vm155, 1.0, %v251
      %v300 = vsel %vm156, 1.0, %v252
      %v301 = vsel %vm157, 1.0, %v253
      %v302 = vsel %vm158, 1.0, %v254
      %v303 = vsel %vm159, 1.0, %v255
      %v304 = vsel %vm160, 1.0, %v256
      %v305 = vsel %vm161, 1.0, %v257
      %v306 = vsel %vm162, 1.0, %v258
      %v307 = vsel %vm163, 1.0, %v259
      %v308 = vsel %vm164, 1.0, %v260
      %v309 = vsel %vm165, 1.0, %v261
      %v310 = vsel %vm166, 1.0, %v262
      %v311 = vsel %vm167, 1.0, %v263
      %v312 = vsel %vm168, 1.0, %v264
      %v313 = vsel %vm169, 1.0, %v265
      %v314 = vsel %vm170, 1.0, %v266
      %v315 = vsel %vm171, 1.0, %v267
      %v316 = vsel %vm172, 1.0, %v268
      %v317 = vsel %vm173, 1.0, %v269
      %v318 = vsel %vm174, 1.0, %v270
      %v319 = vsel %vm175, 1.0, %v271
      %v320 = vsel %vm176, 1.0, %v272
      %v321 = vsel %vm177, 1.0, %v273
      %v322 = vsel %vm178, 1.0, %v274
      %v323 = vsel %vm179, 1.0, %v275
      %v324 = vsel %vm180, 1.0, %v276
      %v325 = vld [vmem:[#allocation2] sm:$0x7]
      %v326 = vadd.f32 %v277, %v280
      %v327 = vadd.f32 %v326, %v283
      %v328 = vadd.f32 %v327, %v286
      %v329 = vadd.f32 %v328, %v289
      %v330 = vadd.f32 %v329, %v292
      %v331 = vadd.f32 %v330, %v295
      %v332 = vadd.f32 %v331, %v298
      %v333 = vadd.f32 %v332, %v301
      %v334 = vadd.f32 %v333, %v304
      %v335 = vadd.f32 %v334, %v307
      %v336 = vadd.f32 %v335, %v310
      %v337 = vadd.f32 %v336, %v313
      %v338 = vadd.f32 %v337, %v316
      %v339 = vadd.f32 %v338, %v319
      %v340 = vadd.f32 %v339, %v322
      %v341 = vrot.slane %v340, 4
      %v342 = vadd.f32 %v340, %v341
      %v343 = vrot.slane %v342, 2
      %v344 = vadd.f32 %v342, %v343
      %v345 = vrot.slane %v344, 1
      %v346 = vadd.f32 %v344, %v345
      %v347 = vadd.f32 %v278, %v281
      %v348 = vadd.f32 %v347, %v284
      %v349 = vadd.f32 %v348, %v287
      %v350 = vadd.f32 %v349, %v290
      %v351 = vadd.f32 %v350, %v293
      %v352 = vadd.f32 %v351, %v296
      %v353 = vadd.f32 %v352, %v299
      %v354 = vadd.f32 %v353, %v302
      %v355 = vadd.f32 %v354, %v305
      %v356 = vadd.f32 %v355, %v308
      %v357 = vadd.f32 %v356, %v311
      %v358 = vadd.f32 %v357, %v314
      %v359 = vadd.f32 %v358, %v317
      %v360 = vadd.f32 %v359, %v320
      %v361 = vadd.f32 %v360, %v323
      %v362 = vrot.slane %v361, 4
      %v363 = vadd.f32 %v361, %v362
      %v364 = vrot.slane %v363, 2
      %v365 = vadd.f32 %v363, %v364
      %v366 = vrot.slane %v365, 1
      %v367 = vadd.f32 %v365, %v366
      %v368 = vadd.f32 %v279, %v282
      %v369 = vadd.f32 %v368, %v285
      %v370 = vadd.f32 %v369, %v288
      %v371 = vadd.f32 %v370, %v291
      %v372 = vadd.f32 %v371, %v294
      %v373 = vadd.f32 %v372, %v297
      %v374 = vadd.f32 %v373, %v300
      %v375 = vadd.f32 %v374, %v303
      %v376 = vadd.f32 %v375, %v306
      %v377 = vadd.f32 %v376, %v309
      %v378 = vadd.f32 %v377, %v312
      %v379 = vadd.f32 %v378, %v315
      %v380 = vadd.f32 %v379, %v318
      %v381 = vadd.f32 %v380, %v321
      %v382 = vadd.f32 %v381, %v324
      %v383 = vrot.slane %v382, 4
      %v384 = vadd.f32 %v382, %v383
      %v385 = vrot.slane %v384, 2
      %v386 = vadd.f32 %v384, %v385
      %v387 = vrot.slane %v386, 1
      %v388 = vadd.f32 %v386, %v387
      %v392 = vrot.slane %v367, 7
      %v393 = vrot.slane %v388, 6
      %vm394 = vcmask 1040384
      %v395 = vsel %vm394, %v346, %v392
      %vm396 = vcmask 1041408
      %v397 = vsel %vm396, %v395, %v393
      %v399 = vadd.f32 %v325, %v397
      %v400 = vlaneseq
      %vm401 = vcmp.ge.s32.totalorder %v400, 0
      %vm402 = vcmp.lt.s32.totalorder %v400, 384
      %vm403 = vmand %vm401, %vm402
      %404 = vst.msk [vmem:[#allocation2] sm:$0x7] %vm403, %v399
    $region18: #{tpu_custom_call.1} parent=1 // loop_footer
      %s27 = sadd.s32 1, %s23
    $region19: #{tpu_custom_call.1} parent=1 // loop_footer_branch
      %22 = sbr.rel target = $region15
    $region20: #{tpu_custom_call.1} parent=1 // loop_exit
      _
    // Predicated region
    $region21: #{tpu_custom_call.1} parent=1 // pred_check
      _
    $region22: #{tpu_custom_call.1} parent=1 // pred_check_branch
      %406 = sbr.rel (0) target = $region24
    $region23: #{tpu_custom_call.1} parent=1 // pred_region
      %408 = vsyncadd [#allocation3], 0
      %s410 = sshll.u32 [#allocation2], 4
      %s411 = int_to_ptr.vmem [resolvable:$true] %s410
      %s412 = sshll.u32 %s2, 4
      %s413 = int_to_ptr.hbm [resolvable:$true] %s412
      %415 = dma.vmem_to_hbm [thread:$0]  %s411, 48, %s413, [#allocation3]
    $region24: #{tpu_custom_call.1} parent=1 // pred_fallthru
      _
    // Predicated region
    $region25: #{tpu_custom_call.1} parent=1 // pred_check
      _
    $region26: #{tpu_custom_call.1} parent=1 // pred_check_branch
      %417 = sbr.rel (0) target = $region28
    $region27: #{tpu_custom_call.1} parent=1 // pred_region
      %419 = dma.done [#allocation3], 48
    $region28: #{tpu_custom_call.1} parent=1 // pred_fallthru
      _
    %420 = vsyncpa [#allocation3], 1

</llo_original>
